<compile_context>
chip_gen: v5e
topology: v5e:2x2
jax: 0.10.0
libtpu: 0.0.40
codegen_flags: <defaults>
</compile_context>

<pallas_src>
import math

import jax
import jax.numpy as jnp
from jax import lax
from jax.experimental import pallas as pl
from jax.experimental.pallas import tpu as pltpu


def _round_up(v, m):
    return ((v + m - 1) // m) * m


def _mlp_kernel(x_ref, w_ref, b_ref, xres_ref, o_ref, acc_ref):
    k = pl.program_id(2)

    @pl.when(k == 0)
    def _init():
        # Fold the bias add into the accumulator init.
        acc_ref[...] = jnp.broadcast_to(
            b_ref[...].astype(jnp.float32), acc_ref.shape)

    # x tile: (tm, tk); w tile: (tn, tk) in PyTorch (F_out, F_in) layout.
    # Contract over the shared K axis (i.e. x @ W^T) -> (tm, tn) f32 partials.
    acc_ref[...] += lax.dot_general(
        x_ref[...], w_ref[...],
        dimension_numbers=(((1,), (1,)), ((), ())),
        preferred_element_type=jnp.float32)

    @pl.when(k == pl.num_programs(2) - 1)
    def _epilogue():
        # Dropout (eval mode) == identity.  Residual add + ReLU in f32.
        y = acc_ref[...] + xres_ref[...].astype(jnp.float32)
        o_ref[...] = jnp.maximum(y, 0.0).astype(o_ref.dtype)


def mlp_forward(x, weight, bias, *, tm=256, tn=256, tk=512):
    """Fused Linear(+bias) -> (eval) Dropout -> residual add -> ReLU.

    x: (B, F), weight: (F_out, F_in) (PyTorch layout, NOT pre-transposed),
    bias: (F_out,).  Requires F_out == F_in (the residual add), exactly as the
    PyTorch module does.  Store weight/bias in bf16 at init time for the
    bandwidth / MXU-throughput win; accumulation stays f32 either way.
    """
    B, F_in = x.shape
    F_out = weight.shape[0]
    assert weight.shape == (F_out, F_in) and bias.shape == (F_out,)
    assert F_out == F_in, "residual add requires out_feature == in_feature"

    # Clamp tiles to the (8,128)-rounded problem size, keeping alignment.
    tm = min(tm, _round_up(B, 8))
    tn = min(tn, _round_up(F_out, 128))
    tk = min(tk, _round_up(F_in, 128))

    # One padded feature size divisible by both the N- and K-tilings, so the
    # same padded x array serves as matmul LHS and as the residual input.
    f_tile = (tn * tk) // math.gcd(tn, tk)      # lcm(tn, tk)
    Mp = _round_up(B, tm)
    Fp = _round_up(F_in, f_tile)

    x_p = x
    if (Mp, Fp) != x.shape:
        x_p = jnp.pad(x, ((0, Mp - B), (0, Fp - F_in)))
    w_p = weight
    if (Fp, Fp) != weight.shape:
        w_p = jnp.pad(weight, ((0, Fp - F_out), (0, Fp - F_in)))
    b_p = bias.reshape(1, F_out)
    if Fp != F_out:
        b_p = jnp.pad(b_p, ((0, 0), (0, Fp - F_out)))

    grid = (Mp // tm, Fp // tn, Fp // tk)

    # Rough VMEM budget: double-buffered input/output tiles + f32 accumulator.
    isz = x.dtype.itemsize
    est = 2 * isz * (tm * tk + tn * tk + tn + 2 * tm * tn) + 4 * tm * tn
    vmem_limit = int(min(max(2 * est + (2 << 20), 16 << 20), 64 << 20))

    out = pl.pallas_call(
        _mlp_kernel,
        out_shape=jax.ShapeDtypeStruct((Mp, Fp), x.dtype),
        grid_spec=pltpu.PrefetchScalarGridSpec(
            num_scalar_prefetch=0,
            grid=grid,
            in_specs=[
                pl.BlockSpec((tm, tk), lambda i, j, k: (i, k)),   # matmul LHS
                pl.BlockSpec((tn, tk), lambda i, j, k: (j, k)),   # W (F_out,F_in)
                pl.BlockSpec((1, tn), lambda i, j, k: (0, j)),    # bias
                pl.BlockSpec((tm, tn), lambda i, j, k: (i, j)),   # residual x
            ],
            out_specs=pl.BlockSpec((tm, tn), lambda i, j, k: (i, j)),
            scratch_shapes=[pltpu.VMEM((tm, tn), jnp.float32)],
        ),
        compiler_params=pltpu.CompilerParams(
            dimension_semantics=("parallel", "parallel", "arbitrary"),
            vmem_limit_bytes=vmem_limit,
        ),
    )(x_p, w_p, b_p, x_p)

    if (Mp, Fp) != (B, F_out):
        out = out[:B, :F_out]
    return out


if __name__ == "__main__":
    key = jax.random.PRNGKey(0)

    # --- Test 1: small f32 shapes at the module's demo scale (padded to 128 lanes). ---
    B, F = 8, 32  # in_feature == out_feature (required by the residual)
    k_x, k_w, k_b, key = jax.random.split(key, 4)
    bound = 1.0 / jnp.sqrt(F)
    x = jax.random.normal(k_x, (B, F), dtype=jnp.float32)
    weight = jax.random.uniform(k_w, (F, F), minval=-bound, maxval=bound,
                                dtype=jnp.float32)
    bias = jax.random.uniform(k_b, (F,), minval=-bound, maxval=bound,
                              dtype=jnp.float32)

    out = mlp_forward(x, weight, bias)
    jax.block_until_ready(out)
    ref = jnp.maximum(x @ weight.T + bias + x, 0.0)
    assert out.shape == ref.shape
    assert jnp.allclose(out, ref, atol=5e-5, rtol=5e-5), "f32 mismatch vs reference"

    # --- Test 2: bf16 operands + multi-tile grid (exercises K accumulation). ---
    B2, F2 = 64, 1024
    k_x, k_w, k_b, key = jax.random.split(key, 4)
    bound2 = 1.0 / jnp.sqrt(F2)
    x2 = jax.random.normal(k_x, (B2, F2), dtype=jnp.float32).astype(jnp.bfloat16)
    w2 = jax.random.uniform(k_w, (F2, F2), minval=-bound2, maxval=bound2,
                            dtype=jnp.float32).astype(jnp.bfloat16)
    b2 = jax.random.uniform(k_b, (F2,), minval=-bound2, maxval=bound2,
                            dtype=jnp.float32).astype(jnp.bfloat16)

    out2 = mlp_forward(x2, w2, b2)   # grid (1, 4, 2) with the default tiles
    jax.block_until_ready(out2)
    x2f, w2f, b2f = (a.astype(jnp.float32) for a in (x2, w2, b2))
    ref2 = jnp.maximum(x2f @ w2f.T + b2f + x2f, 0.0)
    err = jnp.max(jnp.abs(out2.astype(jnp.float32) - ref2))
    assert err < 5e-2, f"bf16 mismatch vs reference (max abs err {err})"

    print("KERNEL_OK")
</pallas_src>

<mosaic_0001>
module attributes {stable_mosaic.version = 11 : i64} {
  func.func @_mlp_kernel(%arg0: i32, %arg1: i32, %arg2: i32, %arg3: memref<8x128xf32, #tpu.memory_space<vmem>>, %arg4: memref<128x128xf32, #tpu.memory_space<vmem>>, %arg5: memref<1x128xf32, #tpu.memory_space<vmem>>, %arg6: memref<8x128xf32, #tpu.memory_space<vmem>>, %arg7: memref<8x128xf32, #tpu.memory_space<vmem>>, %arg8: memref<8x128xf32, #tpu.memory_space<vmem>>) attributes {dimension_semantics = [#tpu.dimension_semantics<parallel>, #tpu.dimension_semantics<parallel>, #tpu.dimension_semantics<arbitrary>], iteration_bounds = array<i64: 1, 1, 1>, scalar_prefetch = 0 : i64, scratch_operands = 1 : i64, tpu.core_type = #tpu.core_type<tc>, window_params = [{transform_indices = @transform_0, window_bounds = array<i64: 8, 128>}, {transform_indices = @transform_1, window_bounds = array<i64: 128, 128>}, {transform_indices = @transform_2, window_bounds = array<i64: 1, 128>}, {transform_indices = @transform_3, window_bounds = array<i64: 8, 128>}, {transform_indices = @transform_4, window_bounds = array<i64: 8, 128>}]} {
    %c0_i32 = arith.constant 0 : i32
    %0 = arith.cmpi eq, %arg2, %c0_i32 : i32
    %1 = arith.extui %0 : i1 to i32
    %c0_i32_0 = arith.constant 0 : i32
    %2 = arith.cmpi ne, %1, %c0_i32_0 : i32
    scf.if %2 {
      %c0_10 = arith.constant 0 : index
      %c0_11 = arith.constant 0 : index
      %12 = vector.load %arg5[%c0_10, %c0_11] : memref<1x128xf32, #tpu.memory_space<vmem>>, vector<1x128xf32>
      %13 = vector.shape_cast %12 : vector<1x128xf32> to vector<1x128xf32>
      %14 = vector.broadcast %13 : vector<1x128xf32> to vector<8x128xf32>
      %c0_12 = arith.constant 0 : index
      %c0_13 = arith.constant 0 : index
      %15 = vector.load %arg8[%c0_12, %c0_13] : memref<8x128xf32, #tpu.memory_space<vmem>>, vector<8x128xf32>
      tpu.vector_store %arg8[%c0_12, %c0_13], %14 {strides = array<i32>} : memref<8x128xf32, #tpu.memory_space<vmem>>, vector<8x128xf32>,
    } else {
    }
    %c0 = arith.constant 0 : index
    %c0_1 = arith.constant 0 : index
    %3 = vector.load %arg8[%c0, %c0_1] : memref<8x128xf32, #tpu.memory_space<vmem>>, vector<8x128xf32>
    %c0_2 = arith.constant 0 : index
    %c0_3 = arith.constant 0 : index
    %4 = vector.load %arg3[%c0_2, %c0_3] : memref<8x128xf32, #tpu.memory_space<vmem>>, vector<8x128xf32>
    %c0_4 = arith.constant 0 : index
    %c0_5 = arith.constant 0 : index
    %5 = vector.load %arg4[%c0_4, %c0_5] : memref<128x128xf32, #tpu.memory_space<vmem>>, vector<128x128xf32>
    %cst = arith.constant dense<0.000000e+00> : vector<8x128xf32>
    %6 = tpu.matmul %4, %5, %cst {dimension_numbers = #tpu.dot_dimension_numbers<[1], [1], [0], [0], [0, 0, 1, 0], [], []>} : vector<8x128xf32>, vector<128x128xf32>, vector<8x128xf32> -> vector<8x128xf32>
    %7 = arith.addf %3, %6 : vector<8x128xf32>
    %c0_6 = arith.constant 0 : index
    %c0_7 = arith.constant 0 : index
    %8 = vector.load %arg8[%c0_6, %c0_7] : memref<8x128xf32, #tpu.memory_space<vmem>>, vector<8x128xf32>
    tpu.vector_store %arg8[%c0_6, %c0_7], %7 {strides = array<i32>} : memref<8x128xf32, #tpu.memory_space<vmem>>, vector<8x128xf32>,
    %c0_i32_8 = arith.constant 0 : i32
    %9 = arith.cmpi eq, %arg2, %c0_i32_8 : i32
    %10 = arith.extui %9 : i1 to i32
    %c0_i32_9 = arith.constant 0 : i32
    %11 = arith.cmpi ne, %10, %c0_i32_9 : i32
    scf.if %11 {
      %c0_10 = arith.constant 0 : index
      %c0_11 = arith.constant 0 : index
      %12 = vector.load %arg8[%c0_10, %c0_11] : memref<8x128xf32, #tpu.memory_space<vmem>>, vector<8x128xf32>
      %c0_12 = arith.constant 0 : index
      %c0_13 = arith.constant 0 : index
      %13 = vector.load %arg6[%c0_12, %c0_13] : memref<8x128xf32, #tpu.memory_space<vmem>>, vector<8x128xf32>
      %14 = arith.addf %12, %13 : vector<8x128xf32>
      %cst_14 = arith.constant 0.000000e+00 : f32
      %15 = vector.broadcast %cst_14 : f32 to vector<8x128xf32>
      %16 = arith.maximumf %14, %15 : vector<8x128xf32>
      %c0_15 = arith.constant 0 : index
      %c0_16 = arith.constant 0 : index
      %17 = vector.load %arg7[%c0_15, %c0_16] : memref<8x128xf32, #tpu.memory_space<vmem>>, vector<8x128xf32>
      tpu.vector_store %arg7[%c0_15, %c0_16], %16 {strides = array<i32>} : memref<8x128xf32, #tpu.memory_space<vmem>>, vector<8x128xf32>,
    } else {
    }
    return
  }
  func.func @transform_0(%arg0: i32, %arg1: i32, %arg2: i32) -> (i32, i32) {
    %c0_i32 = arith.constant 0 : i32
    return %arg0, %arg2 : i32, i32
  }
  func.func @transform_1(%arg0: i32, %arg1: i32, %arg2: i32) -> (i32, i32) {
    %c0_i32 = arith.constant 0 : i32
    return %arg1, %arg2 : i32, i32
  }
  func.func @transform_2(%arg0: i32, %arg1: i32, %arg2: i32) -> (i32, i32) {
    %c0_i32 = arith.constant 0 : i32
    %c0_i32_0 = arith.constant 0 : i32
    return %c0_i32, %arg1 : i32, i32
  }
  func.func @transform_3(%arg0: i32, %arg1: i32, %arg2: i32) -> (i32, i32) {
    %c0_i32 = arith.constant 0 : i32
    return %arg0, %arg1 : i32, i32
  }
  func.func @transform_4(%arg0: i32, %arg1: i32, %arg2: i32) -> (i32, i32) {
    %c0_i32 = arith.constant 0 : i32
    return %arg0, %arg1 : i32, i32
  }
}

</mosaic_0001>

<llo_original>
// kernel: tpu_custom_call.1
$region0: #{tpu_custom_call.1}
  #allocation0 [shape = 'u32[]', space=smem, size = 0x4, offset = 0x4, fixed_abs, tag = 'smem constant byte address 0x4 - core index']
  #allocation1 [shape = 'u32[72,128]{1,0:T(1,128)}', space=vmem, size = 0x9000, scoped, tag = 'internal scratch']
  #allocation2 [shape = 'f32[8,128]{1,0:T(8,128)}', space=vmem, size = 0x1000, scoped, tag = 'scratch operand']
  %s0 = inlined_call_operand.hbm [shape: f32[8,128], index: 0, kind: input, shape index: {}]
  %s1 = inlined_call_operand.hbm [shape: f32[128,128], index: 1, kind: input, shape index: {}]
  %s2 = inlined_call_operand.vmem [shape: f32[1,128], index: 2, kind: input, shape index: {}]
  %s3 = inlined_call_operand.hbm [shape: f32[8,128], index: 3, kind: input, shape index: {}]
  %s4 = inlined_call_operand.hbm [shape: f32[8,128], index: 4, kind: output, shape index: {}]
  %s5 = sld [smem:[#allocation0]]
  $region46: #{tpu_custom_call.1} parent=0
    _
  %s7 = ssub.s32 1, %s5
  %s8 = scalar_select 0, %s7, %s5
  $region1: #{tpu_custom_call.1} parent=0
    #allocation3 [shape = 'u8[4096]{0}', space=vmem, size = 0x1000, scoped, tag = 'input window, operand 0, single buffered']
    #allocation4 [shape = 's32[1]{0}', space=sflag, size = 0x4, scoped, tag = 'scoped memory for tpu_custom_call.1']
    #allocation5 [shape = 's32[1]{0}', space=sflag, size = 0x4, scoped, tag = 'scoped memory for tpu_custom_call.1']
    #allocation6 [shape = 'u8[65536]{0}', space=vmem, size = 0x10000, scoped, tag = 'input window, operand 1, single buffered']
    #allocation7 [shape = 's32[1]{0}', space=sflag, size = 0x4, scoped, tag = 'scoped memory for tpu_custom_call.1']
    #allocation8 [shape = 'u8[4096]{0}', space=vmem, size = 0x1000, scoped, tag = 'input window, operand 3, single buffered']
    #allocation9 [shape = 'u8[4096]{0}', space=vmem, size = 0x1000, scoped, tag = 'output window, operand 0, single buffered']
    %9 = vsyncpa [#allocation4], 0
    %10 = vsyncpa [#allocation7], 0
    %11 = vsyncpa [#allocation5], 0
    // Predicated region
    $region2: #{tpu_custom_call.1} parent=1 // pred_check
      _
    $region3: #{tpu_custom_call.1} parent=1 // pred_check_branch
      %13 = sbr.rel (0) target = $region5
    $region4: #{tpu_custom_call.1} parent=1 // pred_region
      %15 = vsyncadd [#allocation4], 0
      %s17 = sshll.u32 %s0, 4
      %s18 = int_to_ptr.hbm [resolvable:$true] %s17
      %s19 = sshll.u32 [#allocation3], 4
      %s20 = int_to_ptr.vmem [resolvable:$true] %s19
      %22 = dma.hbm_to_vmem [thread:$0]  %s18, 128, %s20, [#allocation4]
    $region5: #{tpu_custom_call.1} parent=1 // pred_fallthru
      _
    // Predicated region
    $region6: #{tpu_custom_call.1} parent=1 // pred_check
      _
    $region7: #{tpu_custom_call.1} parent=1 // pred_check_branch
      %24 = sbr.rel (0) target = $region9
    $region8: #{tpu_custom_call.1} parent=1 // pred_region
      %26 = vsyncadd [#allocation7], 0
      %s27 = sshll.u32 %s1, 4
      %s28 = int_to_ptr.hbm [resolvable:$true] %s27
      %s29 = sshll.u32 [#allocation6], 4
      %s30 = int_to_ptr.vmem [resolvable:$true] %s29
      %35 = dma.hbm_to_vmem [thread:$0]  %s28, 2048, %s30, [#allocation7], 128, 128, 8
    $region9: #{tpu_custom_call.1} parent=1 // pred_fallthru
      _
    // Predicated region
    $region10: #{tpu_custom_call.1} parent=1 // pred_check
      _
    $region11: #{tpu_custom_call.1} parent=1 // pred_check_branch
      %37 = sbr.rel (0) target = $region13
    $region12: #{tpu_custom_call.1} parent=1 // pred_region
      _
    $region13: #{tpu_custom_call.1} parent=1 // pred_fallthru
      _
    // Predicated region
    $region14: #{tpu_custom_call.1} parent=1 // pred_check
      _
    $region15: #{tpu_custom_call.1} parent=1 // pred_check_branch
      %39 = sbr.rel (0) target = $region17
    $region16: #{tpu_custom_call.1} parent=1 // pred_region
      %41 = vsyncadd [#allocation7], 0
      %s43 = sshll.u32 %s3, 4
      %s44 = int_to_ptr.hbm [resolvable:$true] %s43
      %s45 = sshll.u32 [#allocation8], 4
      %s46 = int_to_ptr.vmem [resolvable:$true] %s45
      %48 = dma.hbm_to_vmem [thread:$0]  %s44, 128, %s46, [#allocation7]
    $region17: #{tpu_custom_call.1} parent=1 // pred_fallthru
      _
    // Predicated region
    $region18: #{tpu_custom_call.1} parent=1 // pred_check
      _
    $region19: #{tpu_custom_call.1} parent=1 // pred_check_branch
      %50 = sbr.rel (0) target = $region21
    $region20: #{tpu_custom_call.1} parent=1 // pred_region
      %52 = dma.done [#allocation4], 128
    $region21: #{tpu_custom_call.1} parent=1 // pred_fallthru
      _
    // Predicated region
    $region22: #{tpu_custom_call.1} parent=1 // pred_check
      _
    $region23: #{tpu_custom_call.1} parent=1 // pred_check_branch
      %54 = sbr.rel (0) target = $region25
    $region24: #{tpu_custom_call.1} parent=1 // pred_region
      %56 = dma.done [#allocation7], 2048
    $region25: #{tpu_custom_call.1} parent=1 // pred_fallthru
      _
    // Predicated region
    $region26: #{tpu_custom_call.1} parent=1 // pred_check
      _
    $region27: #{tpu_custom_call.1} parent=1 // pred_check_branch
      %58 = sbr.rel (0) target = $region29
    $region28: #{tpu_custom_call.1} parent=1 // pred_region
      %60 = dma.done [#allocation7], 128
    $region29: #{tpu_custom_call.1} parent=1 // pred_fallthru
      _
    %p61 = scmp.eq.s32.totalorder 0, 0
    // Predicated region
    $region30: #{tpu_custom_call.1} parent=1 // pred_check
      %p62 = pneg %p61
    $region31: #{tpu_custom_call.1} parent=1 // pred_check_branch
      %64 = sbr.rel (%p62) target = $region33
    $region32: #{tpu_custom_call.1} parent=1 // pred_region
      %v65 = vld [vmem:[%s2] sm:$0x1]
      %v67 = vperm.slane %v65, 0
      %69 = vst [vmem:[#allocation2] sm:$0xff] %v67
    $region33: #{tpu_custom_call.1} parent=1 // pred_fallthru
      _
    %v70 = vld [vmem:[#allocation2] sm:$0xff]
    %v71 = vld [vmem:[#allocation3] sm:$0xff]
    %v72 = vld [vmem:[#allocation6] sm:$0xff]
    %v73 = vld [vmem:[#allocation6 + $0x8] sm:$0xff]
    %v74 = vld [vmem:[#allocation6 + $0x10] sm:$0xff]
    %v75 = vld [vmem:[#allocation6 + $0x18] sm:$0xff]
    %v76 = vld [vmem:[#allocation6 + $0x20] sm:$0xff]
    %v77 = vld [vmem:[#allocation6 + $0x28] sm:$0xff]
    %v78 = vld [vmem:[#allocation6 + $0x30] sm:$0xff]
    %v79 = vld [vmem:[#allocation6 + $0x38] sm:$0xff]
    %v80 = vld [vmem:[#allocation6 + $0x40] sm:$0xff]
    %v81 = vld [vmem:[#allocation6 + $0x48] sm:$0xff]
    %v82 = vld [vmem:[#allocation6 + $0x50] sm:$0xff]
    %v83 = vld [vmem:[#allocation6 + $0x58] sm:$0xff]
    %v84 = vld [vmem:[#allocation6 + $0x60] sm:$0xff]
    %v85 = vld [vmem:[#allocation6 + $0x68] sm:$0xff]
    %v86 = vld [vmem:[#allocation6 + $0x70] sm:$0xff]
    %v87 = vld [vmem:[#allocation6 + $0x78] sm:$0xff]
    %88 = vmatpush.xpose.msra.mxu0 %v87
    %89 = vmatpush.xpose.msra.mxu0 %v86
    %90 = vmatpush.xpose.msra.mxu0 %v85
    %91 = vmatpush.xpose.msra.mxu0 %v84
    %92 = vmatpush.xpose.msra.mxu0 %v83
    %93 = vmatpush.xpose.msra.mxu0 %v82
    %94 = vmatpush.xpose.msra.mxu0 %v81
    %95 = vmatpush.xpose.msra.mxu0 %v80
    %96 = vmatpush.xpose.msra.mxu0 %v79
    %97 = vmatpush.xpose.msra.mxu0 %v78
    %98 = vmatpush.xpose.msra.mxu0 %v77
    %99 = vmatpush.xpose.msra.mxu0 %v76
    %100 = vmatpush.xpose.msra.mxu0 %v75
    %101 = vmatpush.xpose.msra.mxu0 %v74
    %102 = vmatpush.xpose.msra.mxu0 %v73
    %103 = vmatpush.xpose.msra.mxu0 %v72
    %104 = vmatmul.f32.gmra.mxu0 %v71
    %v105 = vpop.f32.mrf.mxu0
    %v106 = vadd.f32 0.0, %v105
    %107 = vdwg.mxu0
    %v108 = vadd.f32 %v70, %v106
    %109 = vst [vmem:[#allocation2] sm:$0xff] %v108
    // Predicated region
    $region34: #{tpu_custom_call.1} parent=1 // pred_check
      %p110 = pneg %p61
    $region35: #{tpu_custom_call.1} parent=1 // pred_check_branch
      %112 = sbr.rel (%p110) target = $region37
    $region36: #{tpu_custom_call.1} parent=1 // pred_region
      %v113 = vld [vmem:[#allocation2] sm:$0xff]
      %v114 = vld [vmem:[#allocation8] sm:$0xff]
      %v115 = vadd.f32 %v113, %v114
      %v116 = vmax.f32 %v115, 0.0
      %117 = vst [vmem:[#allocation9] sm:$0xff] %v116
    $region37: #{tpu_custom_call.1} parent=1 // pred_fallthru
      _
    // Predicated region
    $region38: #{tpu_custom_call.1} parent=1 // pred_check
      _
    $region39: #{tpu_custom_call.1} parent=1 // pred_check_branch
      %119 = sbr.rel (0) target = $region41
    $region40: #{tpu_custom_call.1} parent=1 // pred_region
      %121 = vsyncadd [#allocation5], 0
      %s123 = sshll.u32 [#allocation9], 4
      %s124 = int_to_ptr.vmem [resolvable:$true] %s123
      %s125 = sshll.u32 %s4, 4
      %s126 = int_to_ptr.hbm [resolvable:$true] %s125
      %128 = dma.vmem_to_hbm [thread:$0]  %s124, 128, %s126, [#allocation5]
    $region41: #{tpu_custom_call.1} parent=1 // pred_fallthru
      _
    // Predicated region
    $region42: #{tpu_custom_call.1} parent=1 // pred_check
      _
    $region43: #{tpu_custom_call.1} parent=1 // pred_check_branch
      %130 = sbr.rel (0) target = $region45
    $region44: #{tpu_custom_call.1} parent=1 // pred_region
      %132 = dma.done [#allocation5], 128
    $region45: #{tpu_custom_call.1} parent=1 // pred_fallthru
      _
    %133 = vsyncpa [#allocation4], 1
    %134 = vsyncpa [#allocation7], 1
    %135 = vsyncpa [#allocation5], 1

</llo_original>
